<compile_context>
chip_gen: v7x
topology: tpu7x:2x2x1
jax: 0.10.0
libtpu: 0.0.40
codegen_flags: <defaults>
</compile_context>

<pallas_src>
import jax
import jax.numpy as jnp
from jax.experimental import pallas as pl
from jax.experimental.pallas import tpu as pltpu


def _round_up(x, m):
    return ((x + m - 1) // m) * m


def dqn_kernel(x_ref, w1_ref, b1_ref, w2_ref, b2_ref, o_ref):
    # Hidden layer: (TB, S) @ (S, H) -> f32 accumulate, bias + ReLU in f32.
    h = jnp.dot(x_ref[...], w1_ref[...], preferred_element_type=jnp.float32)
    h = jnp.maximum(h + b1_ref[...], 0.0)
    # Output layer: (TB, H) @ (H, A_pad) -> f32 accumulate, bias in f32.
    q = jnp.dot(h.astype(w2_ref.dtype), w2_ref[...],
                preferred_element_type=jnp.float32)
    o_ref[...] = (q + b2_ref[...]).astype(o_ref.dtype)


def dqn_forward(state, w1, b1, w2, b2, *, block_b=256, use_bf16=False):
    """Fused DQN forward.

    state: (B, no_states) f32
    w1:    (no_states, 128) f32      b1: (1, 128) f32
    w2:    (128, no_actions) f32     b2: (1, no_actions) f32
    Returns (B, no_actions) f32 Q-values.
    """
    B, S = state.shape
    H = w1.shape[1]
    A = w2.shape[1]

    # --- Pad action dim to a multiple of 128 for lane-dense output / full MXU lanes.
    A_pad = _round_up(max(A, 128), 128)
    if A_pad != A:
        w2 = jnp.pad(w2, ((0, 0), (0, A_pad - A)))
        b2 = jnp.pad(b2, ((0, 0), (0, A_pad - A)))

    # --- Pick a batch tile (multiple of 8 sublanes) and pad B to a whole number of tiles.
    tb = min(block_b, _round_up(B, 8))
    B_pad = _round_up(B, tb)
    if B_pad != B:
        state = jnp.pad(state, ((0, B_pad - B), (0, 0)))
    n_tiles = B_pad // tb

    # --- Optional bf16 matmul inputs (f32 accumulation, f32 bias/ReLU kept in-kernel).
    if use_bf16:
        state = state.astype(jnp.bfloat16)
        w1 = w1.astype(jnp.bfloat16)
        w2 = w2.astype(jnp.bfloat16)

    out = pl.pallas_call(
        dqn_kernel,
        out_shape=jax.ShapeDtypeStruct((B_pad, A_pad), jnp.float32),
        grid=(n_tiles,),
        in_specs=[
            # x: blocked along batch — DMA'd per grid step (double-buffered).
            pl.BlockSpec((tb, S), lambda i: (i, 0)),
            # Weights/biases: constant block index -> DMA'd once, resident in VMEM.
            pl.BlockSpec((S, H), lambda i: (0, 0)),
            pl.BlockSpec((1, H), lambda i: (0, 0)),
            pl.BlockSpec((H, A_pad), lambda i: (0, 0)),
            pl.BlockSpec((1, A_pad), lambda i: (0, 0)),
        ],
        out_specs=pl.BlockSpec((tb, A_pad), lambda i: (i, 0)),
        compiler_params=pltpu.CompilerParams(
            # Batch tiles are independent -> shards across both TCs on v7x.
            dimension_semantics=("parallel",),
        ),
    )(state, w1, b1, w2, b2)

    # Strip batch / action padding in the wrapper (layout plumbing, not compute).
    return out[:B, :A]


def init_dqn_params(key, no_states, no_actions, hidden=128):
    """Deterministic init matching nn.Linear default (U[-1/sqrt(fan_in), 1/sqrt(fan_in)])."""
    k1, k2, k3, k4 = jax.random.split(key, 4)
    bound1 = 1.0 / jnp.sqrt(jnp.float32(no_states))
    bound2 = 1.0 / jnp.sqrt(jnp.float32(hidden))
    # Stored transposed relative to PyTorch ((out,in) -> (in,out)) so kernel does x @ W.
    w1 = jax.random.uniform(k1, (no_states, hidden), jnp.float32, -bound1, bound1)
    b1 = jax.random.uniform(k2, (1, hidden), jnp.float32, -bound1, bound1)
    w2 = jax.random.uniform(k3, (hidden, no_actions), jnp.float32, -bound2, bound2)
    b2 = jax.random.uniform(k4, (1, no_actions), jnp.float32, -bound2, bound2)
    return w1, b1, w2, b2


if __name__ == "__main__":
    key = jax.random.PRNGKey(0)
    kx, kp = jax.random.split(key)

    # Replay-batch sized input (keeps the MXU busy and exercises the batch-tiled grid:
    # 512 / 256 = 2 grid steps), while weights stay resident across steps.
    B = 512          # batch (replay batch / many env states per call)
    NO_STATES = 8    # no_states
    NO_ACTIONS = 4   # no_actions
    HIDDEN = 128

    state = jax.random.normal(kx, (B, NO_STATES), jnp.float32)
    w1, b1, w2, b2 = init_dqn_params(kp, NO_STATES, NO_ACTIONS, HIDDEN)

    qvalue = dqn_forward(state, w1, b1, w2, b2, block_b=256)
    qvalue = jax.block_until_ready(qvalue)

    # Pure-JAX reference check of forward semantics.
    ref = jnp.maximum(state @ w1 + b1, 0.0) @ w2 + b2
    assert qvalue.shape == (B, NO_ACTIONS)
    assert jnp.allclose(qvalue, ref, atol=1e-5, rtol=1e-5)

    # Also exercise the tiny-batch path (single get_action-style call, B < tile).
    q_small = dqn_forward(state[:8], w1, b1, w2, b2, block_b=256)
    q_small = jax.block_until_ready(q_small)
    assert jnp.allclose(q_small, ref[:8], atol=1e-5, rtol=1e-5)

    # TODO(synk): train_model / get_action (optimizer step, argmax) are host-side RL loop
    # logic, not part of the forward kernel.

    print("KERNEL_OK")
</pallas_src>

<mosaic_0001>
module attributes {stable_mosaic.version = 11 : i64} {
  func.func @dqn_kernel(%arg0: i32, %arg1: memref<256x8xf32, #tpu.memory_space<vmem>>, %arg2: memref<8x128xf32, #tpu.memory_space<vmem>>, %arg3: memref<1x128xf32, #tpu.memory_space<vmem>>, %arg4: memref<128x128xf32, #tpu.memory_space<vmem>>, %arg5: memref<1x128xf32, #tpu.memory_space<vmem>>, %arg6: memref<256x128xf32, #tpu.memory_space<vmem>>) attributes {dimension_semantics = [#tpu.dimension_semantics<parallel>], iteration_bounds = array<i64: 2>, scalar_prefetch = 0 : i64, scratch_operands = 0 : i64, tpu.core_type = #tpu.core_type<tc>, window_params = [{transform_indices = @transform_0, window_bounds = array<i64: 256, 8>}, {pipeline_mode = #tpu.pipeline_mode<synchronous>, transform_indices = @transform_1, window_bounds = array<i64: 8, 128>}, {pipeline_mode = #tpu.pipeline_mode<synchronous>, transform_indices = @transform_2, window_bounds = array<i64: 1, 128>}, {pipeline_mode = #tpu.pipeline_mode<synchronous>, transform_indices = @transform_3, window_bounds = array<i64: 128, 128>}, {pipeline_mode = #tpu.pipeline_mode<synchronous>, transform_indices = @transform_4, window_bounds = array<i64: 1, 128>}, {transform_indices = @transform_5, window_bounds = array<i64: 256, 128>}]} {
    %c0 = arith.constant 0 : index
    %c0_0 = arith.constant 0 : index
    %0 = vector.load %arg1[%c0, %c0_0] : memref<256x8xf32, #tpu.memory_space<vmem>>, vector<256x8xf32>
    %c0_1 = arith.constant 0 : index
    %c0_2 = arith.constant 0 : index
    %1 = vector.load %arg2[%c0_1, %c0_2] : memref<8x128xf32, #tpu.memory_space<vmem>>, vector<8x128xf32>
    %cst = arith.constant dense<0.000000e+00> : vector<256x128xf32>
    %2 = tpu.matmul %0, %1, %cst {dimension_numbers = #tpu.dot_dimension_numbers<[1], [0], [0], [1], [0, 0, 1, 1], [], []>} : vector<256x8xf32>, vector<8x128xf32>, vector<256x128xf32> -> vector<256x128xf32>
    %c0_3 = arith.constant 0 : index
    %c0_4 = arith.constant 0 : index
    %3 = vector.load %arg3[%c0_3, %c0_4] : memref<1x128xf32, #tpu.memory_space<vmem>>, vector<1x128xf32>
    %4 = vector.broadcast %3 : vector<1x128xf32> to vector<256x128xf32>
    %5 = arith.addf %2, %4 : vector<256x128xf32>
    %cst_5 = arith.constant 0.000000e+00 : f32
    %6 = vector.broadcast %cst_5 : f32 to vector<256x128xf32>
    %7 = arith.maximumf %5, %6 : vector<256x128xf32>
    %c0_6 = arith.constant 0 : index
    %c0_7 = arith.constant 0 : index
    %8 = vector.load %arg4[%c0_6, %c0_7] : memref<128x128xf32, #tpu.memory_space<vmem>>, vector<128x128xf32>
    %cst_8 = arith.constant dense<0.000000e+00> : vector<256x128xf32>
    %9 = tpu.matmul %7, %8, %cst_8 {dimension_numbers = #tpu.dot_dimension_numbers<[1], [0], [0], [1], [0, 0, 1, 1], [], []>} : vector<256x128xf32>, vector<128x128xf32>, vector<256x128xf32> -> vector<256x128xf32>
    %c0_9 = arith.constant 0 : index
    %c0_10 = arith.constant 0 : index
    %10 = vector.load %arg5[%c0_9, %c0_10] : memref<1x128xf32, #tpu.memory_space<vmem>>, vector<1x128xf32>
    %11 = vector.broadcast %10 : vector<1x128xf32> to vector<256x128xf32>
    %12 = arith.addf %9, %11 : vector<256x128xf32>
    %c0_11 = arith.constant 0 : index
    %c0_12 = arith.constant 0 : index
    %13 = vector.load %arg6[%c0_11, %c0_12] : memref<256x128xf32, #tpu.memory_space<vmem>>, vector<256x128xf32>
    tpu.vector_store %arg6[%c0_11, %c0_12], %12 {strides = array<i32>} : memref<256x128xf32, #tpu.memory_space<vmem>>, vector<256x128xf32>,
    return
  }
  func.func @transform_0(%arg0: i32) -> (i32, i32) {
    %c0_i32 = arith.constant 0 : i32
    %c0_i32_0 = arith.constant 0 : i32
    return %arg0, %c0_i32 : i32, i32
  }
  func.func @transform_1(%arg0: i32) -> (i32, i32) {
    %c0_i32 = arith.constant 0 : i32
    %c0_i32_0 = arith.constant 0 : i32
    %c0_i32_1 = arith.constant 0 : i32
    return %c0_i32, %c0_i32_0 : i32, i32
  }
  func.func @transform_2(%arg0: i32) -> (i32, i32) {
    %c0_i32 = arith.constant 0 : i32
    %c0_i32_0 = arith.constant 0 : i32
    %c0_i32_1 = arith.constant 0 : i32
    return %c0_i32, %c0_i32_0 : i32, i32
  }
  func.func @transform_3(%arg0: i32) -> (i32, i32) {
    %c0_i32 = arith.constant 0 : i32
    %c0_i32_0 = arith.constant 0 : i32
    %c0_i32_1 = arith.constant 0 : i32
    return %c0_i32, %c0_i32_0 : i32, i32
  }
  func.func @transform_4(%arg0: i32) -> (i32, i32) {
    %c0_i32 = arith.constant 0 : i32
    %c0_i32_0 = arith.constant 0 : i32
    %c0_i32_1 = arith.constant 0 : i32
    return %c0_i32, %c0_i32_0 : i32, i32
  }
  func.func @transform_5(%arg0: i32) -> (i32, i32) {
    %c0_i32 = arith.constant 0 : i32
    %c0_i32_0 = arith.constant 0 : i32
    return %arg0, %c0_i32 : i32, i32
  }
}

</mosaic_0001>

<llo_original>
// kernel: tpu_custom_call.1
$region0: #{tpu_custom_call.1}
  #allocation0 [shape = 'u32[]', space=smem, size = 0x4, offset = 0x4, fixed_abs, tag = 'smem constant byte address 0x4 - core index']
  #allocation1 [shape = 'u32[144,128]{1,0:T(1,128)}', space=vmem, size = 0x12000, scoped, tag = 'internal scratch']
  %s0 = inlined_call_operand.vmem [shape: f32[512,8], index: 0, kind: input, shape index: {}]
  %s1 = inlined_call_operand.vmem [shape: f32[8,128], index: 1, kind: input, shape index: {}]
  %s2 = inlined_call_operand.vmem [shape: f32[1,128], index: 2, kind: input, shape index: {}]
  %s3 = inlined_call_operand.vmem [shape: f32[128,128], index: 3, kind: input, shape index: {}]
  %s4 = inlined_call_operand.vmem [shape: f32[1,128], index: 4, kind: input, shape index: {}]
  %s5 = inlined_call_operand.hbm [shape: f32[512,128], index: 5, kind: output, shape index: {}]
  %s6 = sld [smem:[#allocation0]]
  $region53: #{tpu_custom_call.1} parent=0
    _
  %s8 = ssub.s32 1, %s6
  %s9 = scalar_select 0, %s8, %s6
  $region1: #{tpu_custom_call.1} parent=0
    #allocation2 [shape = 'u8[262144]{0}', space=vmem, size = 0x40000, scoped, tag = 'output window, operand 0']
    #allocation3 [shape = 's32[2]{0}', space=sflag, size = 0x8, scoped, tag = 'scoped memory for tpu_custom_call.1']
    %10 = vsyncpa [#allocation3], 0
    %s11 = scalar_lea.sflag [#allocation3], 1
    %12 = vsyncpa %s11, 0
    loop: start=0, step=1, limit=4
    $region2: #{tpu_custom_call.1} parent=1 // loop_pre_header
      _
    $region3: #{tpu_custom_call.1} parent=1 // loop_header
      %s14 = sphi 0, %s18
      %p15 = scmp.ge.s32.totalorder %s14, 4
      %s24 = sphi 0, %s26
      %s27 = sphi 0, %s24
      %s28 = sphi 0, %s27
      %s44 = sphi 0, %s28
      %s48 = sphi 0, %s48
      %s50 = sphi 0, %s48
      %s51 = sphi 0, %s50
      %s65 = sphi 0, %s51
      %s69 = sphi 0, %s69
      %s71 = sphi 0, %s69
      %s72 = sphi 0, %s71
      %s86 = sphi 0, %s72
      %s90 = sphi 0, %s90
      %s92 = sphi 0, %s90
      %s93 = sphi 0, %s92
      %s107 = sphi 0, %s93
      %s111 = sphi 0, %s111
      %s113 = sphi 0, %s111
      %s114 = sphi 0, %s113
      %s128 = sphi 0, %s114
      %s134 = sphi 0, %s136
      %s137 = sphi 0, %s134
      %s138 = sphi 0, %s137
      %s154 = sphi 0, %s138
    $region4: #{tpu_custom_call.1} parent=1 // loop_header_branch
      %17 = sbr.rel (%p15) target = $region8
    $region5: #{tpu_custom_call.1} parent=1 // loop_body
      %s19 = ssub.s32 %s14, 1
      %s20 = ssub.s32 %s14, 2
      %s21 = sadd.s32 %s14, 1
      %s22 = ssub.s32 %s14, %s21
      %p23 = scmp.eq.s32.totalorder %s22, 0
      %s25 = sadd.s32 %s24, 1
      %s26 = scalar_select %p23, %s24, %s25
      %p29 = pneg %p23
      %p30 = scmp.eq.s32.totalorder %s14, 1
      %p31 = por %p29, %p30
      %p32 = scmp.ne.s32.totalorder %s24, %s27
      %p33 = scmp.eq.s32.totalorder %s14, 0
      %p34 = por %p32, %p33
      %p35 = scmp.ne.s32.totalorder %s24, %s27
      %p36 = scmp.eq.s32.totalorder %s19, 1
      %p37 = por %p35, %p36
      %p38 = scmp.ne.s32.totalorder %s27, %s28
      %p39 = scmp.eq.s32.totalorder %s19, 0
      %p40 = por %p38, %p39
      %p41 = scmp.ne.s32.totalorder %s27, %s28
      %p42 = scmp.eq.s32.totalorder %s20, 1
      %p43 = por %p41, %p42
      %p45 = scmp.ne.s32.totalorder %s28, %s44
      %p46 = scmp.eq.s32.totalorder %s20, 0
      %p47 = por %p45, %p46
      %s49 = sadd.s32 %s48, 1
      %p52 = scmp.eq.s32.totalorder %s14, 1
      %p53 = scmp.ne.s32.totalorder %s48, %s50
      %p54 = scmp.eq.s32.totalorder %s14, 0
      %p55 = por %p53, %p54
      %p56 = scmp.ne.s32.totalorder %s48, %s50
      %p57 = scmp.eq.s32.totalorder %s19, 1
      %p58 = por %p56, %p57
      %p59 = scmp.ne.s32.totalorder %s50, %s51
      %p60 = scmp.eq.s32.totalorder %s19, 0
      %p61 = por %p59, %p60
      %p62 = scmp.ne.s32.totalorder %s50, %s51
      %p63 = scmp.eq.s32.totalorder %s20, 1
      %p64 = por %p62, %p63
      %p66 = scmp.ne.s32.totalorder %s51, %s65
      %p67 = scmp.eq.s32.totalorder %s20, 0
      %p68 = por %p66, %p67
      %s70 = sadd.s32 %s69, 1
      %p73 = scmp.eq.s32.totalorder %s14, 1
      %p74 = scmp.ne.s32.totalorder %s69, %s71
      %p75 = scmp.eq.s32.totalorder %s14, 0
      %p76 = por %p74, %p75
      %p77 = scmp.ne.s32.totalorder %s69, %s71
      %p78 = scmp.eq.s32.totalorder %s19, 1
      %p79 = por %p77, %p78
      %p80 = scmp.ne.s32.totalorder %s71, %s72
      %p81 = scmp.eq.s32.totalorder %s19, 0
      %p82 = por %p80, %p81
      %p83 = scmp.ne.s32.totalorder %s71, %s72
      %p84 = scmp.eq.s32.totalorder %s20, 1
      %p85 = por %p83, %p84
      %p87 = scmp.ne.s32.totalorder %s72, %s86
      %p88 = scmp.eq.s32.totalorder %s20, 0
      %p89 = por %p87, %p88
      %s91 = sadd.s32 %s90, 1
      %p94 = scmp.eq.s32.totalorder %s14, 1
      %p95 = scmp.ne.s32.totalorder %s90, %s92
      %p96 = scmp.eq.s32.totalorder %s14, 0
      %p97 = por %p95, %p96
      %p98 = scmp.ne.s32.totalorder %s90, %s92
      %p99 = scmp.eq.s32.totalorder %s19, 1
      %p100 = por %p98, %p99
      %p101 = scmp.ne.s32.totalorder %s92, %s93
      %p102 = scmp.eq.s32.totalorder %s19, 0
      %p103 = por %p101, %p102
      %p104 = scmp.ne.s32.totalorder %s92, %s93
      %p105 = scmp.eq.s32.totalorder %s20, 1
      %p106 = por %p104, %p105
      %p108 = scmp.ne.s32.totalorder %s93, %s107
      %p109 = scmp.eq.s32.totalorder %s20, 0
      %p110 = por %p108, %p109
      %s112 = sadd.s32 %s111, 1
      %p115 = scmp.eq.s32.totalorder %s14, 1
      %p116 = scmp.ne.s32.totalorder %s111, %s113
      %p117 = scmp.eq.s32.totalorder %s14, 0
      %p118 = por %p116, %p117
      %p119 = scmp.ne.s32.totalorder %s111, %s113
      %p120 = scmp.eq.s32.totalorder %s19, 1
      %p121 = por %p119, %p120
      %p122 = scmp.ne.s32.totalorder %s113, %s114
      %p123 = scmp.eq.s32.totalorder %s19, 0
      %p124 = por %p122, %p123
      %p125 = scmp.ne.s32.totalorder %s113, %s114
      %p126 = scmp.eq.s32.totalorder %s20, 1
      %p127 = por %p125, %p126
      %p129 = scmp.ne.s32.totalorder %s114, %s128
      %p130 = scmp.eq.s32.totalorder %s20, 0
      %p131 = por %p129, %p130
      %s132 = ssub.s32 %s14, %s21
      %p133 = scmp.eq.s32.totalorder %s132, 0
      %s135 = sadd.s32 %s134, 1
      %s136 = scalar_select %p133, %s134, %s135
      %p139 = pneg %p133
      %p140 = scmp.eq.s32.totalorder %s14, 1
      %p141 = por %p139, %p140
      %p142 = scmp.ne.s32.totalorder %s134, %s137
      %p143 = scmp.eq.s32.totalorder %s14, 0
      %p144 = por %p142, %p143
      %p145 = scmp.ne.s32.totalorder %s134, %s137
      %p146 = scmp.eq.s32.totalorder %s19, 1
      %p147 = por %p145, %p146
      %p148 = scmp.ne.s32.totalorder %s137, %s138
      %p149 = scmp.eq.s32.totalorder %s19, 0
      %p150 = por %p148, %p149
      %p151 = scmp.ne.s32.totalorder %s137, %s138
      %p152 = scmp.eq.s32.totalorder %s20, 1
      %p153 = por %p151, %p152
      %p155 = scmp.ne.s32.totalorder %s138, %s154
      %p156 = scmp.eq.s32.totalorder %s20, 0
      %p157 = por %p155, %p156
      %p158 = scmp.le.s32.totalorder 1, %s14
      %p159 = scmp.lt.s32.totalorder %s14, 3
      %p160 = pnand %p158, %p159
      %p161 = pneg %p160
      // Predicated region
      $region9: #{tpu_custom_call.1} parent=5 // pred_check
        _
      $region10: #{tpu_custom_call.1} parent=5 // pred_check_branch
        %163 = sbr.rel (%p160) target = $region12
      $region11: #{tpu_custom_call.1} parent=5 // pred_region
        %s164 = ssub.s32 %s14, 1
        // Predicated region
        $region13: #{tpu_custom_call.1} parent=11 // pred_check
          %p165 = pneg %p61
        $region14: #{tpu_custom_call.1} parent=11 // pred_check_branch
          %167 = sbr.rel (%p165) target = $region16
        $region15: #{tpu_custom_call.1} parent=11 // pred_region
          _
        $region16: #{tpu_custom_call.1} parent=11 // pred_fallthru
          _
        // Predicated region
        $region17: #{tpu_custom_call.1} parent=11 // pred_check
          %p168 = pneg %p82
        $region18: #{tpu_custom_call.1} parent=11 // pred_check_branch
          %170 = sbr.rel (%p168) target = $region20
        $region19: #{tpu_custom_call.1} parent=11 // pred_region
          _
        $region20: #{tpu_custom_call.1} parent=11 // pred_fallthru
          _
        // Predicated region
        $region21: #{tpu_custom_call.1} parent=11 // pred_check
          %p171 = pneg %p103
        $region22: #{tpu_custom_call.1} parent=11 // pred_check_branch
          %173 = sbr.rel (%p171) target = $region24
        $region23: #{tpu_custom_call.1} parent=11 // pred_region
          _
        $region24: #{tpu_custom_call.1} parent=11 // pred_fallthru
          _
        // Predicated region
        $region25: #{tpu_custom_call.1} parent=11 // pred_check
          %p174 = pneg %p124
        $region26: #{tpu_custom_call.1} parent=11 // pred_check_branch
          %176 = sbr.rel (%p174) target = $region28
        $region27: #{tpu_custom_call.1} parent=11 // pred_region
          _
        $region28: #{tpu_custom_call.1} parent=11 // pred_fallthru
          _
      $region12: #{tpu_custom_call.1} parent=5 // pred_fallthru
        _
      %p177 = scmp.lt.s32.totalorder %s14, 2
      // Predicated region
      $region29: #{tpu_custom_call.1} parent=5 // pred_check
        %p178 = pneg %p177
      $region30: #{tpu_custom_call.1} parent=5 // pred_check_branch
        %180 = sbr.rel (%p178) target = $region32
      $region31: #{tpu_custom_call.1} parent=5 // pred_region
        // Predicated region
        $region33: #{tpu_custom_call.1} parent=31 // pred_check
          %p181 = pneg %p34
        $region34: #{tpu_custom_call.1} parent=31 // pred_check_branch
          %183 = sbr.rel (%p181) target = $region36
        $region35: #{tpu_custom_call.1} parent=31 // pred_region
          %s184 = smul.u32 32, %s14
          %p185 = scmp.lt.s32.totalorder %s184, 63
          %s186 = scalar_select %p185, %s184, 63
          %s187 = smul.addr %s186, 8
          %s188 = scalar_lea.vmem %s0, %s187
          %s189 = smul.u32 32, %s14
        $region36: #{tpu_custom_call.1} parent=31 // pred_fallthru
          _
      $region32: #{tpu_custom_call.1} parent=5 // pred_fallthru
        _
      %p190 = scmp.le.s32.totalorder 1, %s14
      %p191 = scmp.lt.s32.totalorder %s14, 3
      %p192 = pnand %p190, %p191
      %p193 = pneg %p192
      // Predicated region
      $region37: #{tpu_custom_call.1} parent=5 // pred_check
        _
      $region38: #{tpu_custom_call.1} parent=5 // pred_check_branch
        %195 = sbr.rel (%p192) target = $region40
      $region39: #{tpu_custom_call.1} parent=5 // pred_region
        %s196 = ssub.s32 %s14, 1
        %s197 = smul.u32 32, %s19
        %p198 = scmp.lt.s32.totalorder %s197, 63
        %s199 = scalar_select %p198, %s197, 63
        %s200 = smul.addr %s199, 8
        %s201 = scalar_lea.vmem %s0, %s200
        %p202 = pneg %p40
        %p203 = pneg %p37
        %p204 = pneg %p61
        %p205 = pneg %p58
        %p206 = pneg %p82
        %p207 = pneg %p79
        %p208 = pneg %p103
        %p209 = pneg %p100
        %p210 = pneg %p124
        %p211 = pneg %p121
        %p212 = pneg %p150
        %p213 = pneg %p147
        %s214 = sand.u32 %s137, 1
        %s215 = scalar_lea.sflag [#allocation3], %s214
        %s216 = sand.u32 %s137, 1
        %s217 = smul.addr %s216, 256
        %s218 = scalar_lea.vmem [#allocation2], %s217
        %s219 = smul.u32 32, %s19
        %p220 = scmp.lt.s32.totalorder %s219, 63
        %s221 = scalar_select %p220, %s219, 63
        %s222 = smul.addr %s221, 8
        %s223 = scalar_lea.vmem %s0, %s222
        %s224 = smul.u32 32, %s19
        %s225 = smul.u32 32, %s19
        %v226 = vld [vmem:[%s223] sm:$0xff]
        %v227 = vld [vmem:[%s223 + $0x8] sm:$0xff]
        %v228 = vld [vmem:[%s223 + $0x10] sm:$0xff]
        %v229 = vld [vmem:[%s223 + $0x18] sm:$0xff]
        %v230 = vld [vmem:[%s223 + $0x20] sm:$0xff]
        %v231 = vld [vmem:[%s223 + $0x28] sm:$0xff]
        %v232 = vld [vmem:[%s223 + $0x30] sm:$0xff]
        %v233 = vld [vmem:[%s223 + $0x38] sm:$0xff]
        %v234 = vld [vmem:[%s223 + $0x40] sm:$0xff]
        %v235 = vld [vmem:[%s223 + $0x48] sm:$0xff]
        %v236 = vld [vmem:[%s223 + $0x50] sm:$0xff]
        %v237 = vld [vmem:[%s223 + $0x58] sm:$0xff]
        %v238 = vld [vmem:[%s223 + $0x60] sm:$0xff]
        %v239 = vld [vmem:[%s223 + $0x68] sm:$0xff]
        %v240 = vld [vmem:[%s223 + $0x70] sm:$0xff]
        %v241 = vld [vmem:[%s223 + $0x78] sm:$0xff]
        %v242 = vld [vmem:[%s223 + $0x80] sm:$0xff]
        %v243 = vld [vmem:[%s223 + $0x88] sm:$0xff]
        %v244 = vld [vmem:[%s223 + $0x90] sm:$0xff]
        %v245 = vld [vmem:[%s223 + $0x98] sm:$0xff]
        %v246 = vld [vmem:[%s223 + $0xa0] sm:$0xff]
        %v247 = vld [vmem:[%s223 + $0xa8] sm:$0xff]
        %v248 = vld [vmem:[%s223 + $0xb0] sm:$0xff]
        %v249 = vld [vmem:[%s223 + $0xb8] sm:$0xff]
        %v250 = vld [vmem:[%s223 + $0xc0] sm:$0xff]
        %v251 = vld [vmem:[%s223 + $0xc8] sm:$0xff]
        %v252 = vld [vmem:[%s223 + $0xd0] sm:$0xff]
        %v253 = vld [vmem:[%s223 + $0xd8] sm:$0xff]
        %v254 = vld [vmem:[%s223 + $0xe0] sm:$0xff]
        %v255 = vld [vmem:[%s223 + $0xe8] sm:$0xff]
        %v256 = vld [vmem:[%s223 + $0xf0] sm:$0xff]
        %v257 = vld [vmem:[%s223 + $0xf8] sm:$0xff]
        %v258 = vld [vmem:[%s1] sm:$0xff]
        %v259 = vld [vmem:[%s2] sm:$0x1]
        %v261 = vlaneseq
        %v262 = vshrl.u32 %v261, 7
        %v263 = vsub.s32 0, %v262
        %v264 = vrot.slane %v259, %v263
        %vm266 = vcmask 64512
        %v268 = vsel %vm266, %v226, 0
        %v271 = vsel %vm266, %v227, 0
        %v274 = vsel %vm266, %v228, 0
        %v277 = vsel %vm266, %v229, 0
        %v280 = vsel %vm266, %v230, 0
        %v283 = vsel %vm266, %v231, 0
        %v286 = vsel %vm266, %v232, 0
        %v289 = vsel %vm266, %v233, 0
        %v292 = vsel %vm266, %v234, 0
        %v295 = vsel %vm266, %v235, 0
        %v298 = vsel %vm266, %v236, 0
        %v301 = vsel %vm266, %v237, 0
        %v304 = vsel %vm266, %v238, 0
        %v307 = vsel %vm266, %v239, 0
        %v310 = vsel %vm266, %v240, 0
        %v313 = vsel %vm266, %v241, 0
        %v316 = vsel %vm266, %v242, 0
        %v319 = vsel %vm266, %v243, 0
        %v322 = vsel %vm266, %v244, 0
        %v325 = vsel %vm266, %v245, 0
        %v328 = vsel %vm266, %v246, 0
        %v331 = vsel %vm266, %v247, 0
        %v334 = vsel %vm266, %v248, 0
        %v337 = vsel %vm266, %v249, 0
        %v340 = vsel %vm266, %v250, 0
        %v343 = vsel %vm266, %v251, 0
        %v346 = vsel %vm266, %v252, 0
        %v349 = vsel %vm266, %v253, 0
        %v352 = vsel %vm266, %v254, 0
        %v355 = vsel %vm266, %v255, 0
        %v358 = vsel %vm266, %v256, 0
        %v361 = vsel %vm266, %v257, 0
        %363 = vmatprep.subr.mxu0 0.0
        %364 = vmatpush1.msra.mxu0 %v258
        %365 = vmatprep.subr.mxu0 0.0
        %366 = vmatpush1.msra.mxu0 0.0
        %367 = vmatprep.subr.mxu0 0.0
        %368 = vmatpush1.msra.mxu0 0.0
        %369 = vmatprep.subr.mxu0 0.0
        %370 = vmatpush1.msra.mxu0 0.0
        %371 = vmatprep.subr.mxu0 0.0
        %372 = vmatpush1.msra.mxu0 0.0
        %373 = vmatprep.subr.mxu0 0.0
        %374 = vmatpush1.msra.mxu0 0.0
        %375 = vmatprep.subr.mxu0 0.0
        %376 = vmatpush1.msra.mxu0 0.0
        %377 = vmatprep.subr.mxu0 0.0
        %378 = vmatpush1.msra.mxu0 0.0
        %379 = vmatprep.subr.mxu0 0.0
        %380 = vmatpush1.msra.mxu0 0.0
        %381 = vmatprep.subr.mxu0 0.0
        %382 = vmatpush1.msra.mxu0 0.0
        %383 = vmatprep.subr.mxu0 0.0
        %384 = vmatpush1.msra.mxu0 0.0
        %385 = vmatprep.subr.mxu0 0.0
        %386 = vmatpush1.msra.mxu0 0.0
        %387 = vmatprep.subr.mxu0 0.0
        %388 = vmatpush1.msra.mxu0 0.0
        %389 = vmatprep.subr.mxu0 0.0
        %390 = vmatpush1.msra.mxu0 0.0
        %391 = vmatprep.subr.mxu0 0.0
        %392 = vmatpush1.msra.mxu0 0.0
        %393 = vmatprep.subr.mxu0 0.0
        %394 = vmatpush1.msra.mxu0 0.0
        %395 = vmatprep.subr.mxu0 0.0
        %396 = vmatpush1.msra.mxu0 0.0
        %397 = vmatprep.subr.mxu0 0.0
        %398 = vmatpush1.msra.mxu0 0.0
        %399 = vmatprep.subr.mxu0 0.0
        %400 = vmatpush1.msra.mxu0 0.0
        %401 = vmatprep.subr.mxu0 0.0
        %402 = vmatpush1.msra.mxu0 0.0
        %403 = vmatprep.subr.mxu0 0.0
        %404 = vmatpush1.msra.mxu0 0.0
        %405 = vmatprep.subr.mxu0 0.0
        %406 = vmatpush1.msra.mxu0 0.0
        %407 = vmatprep.subr.mxu0 0.0
        %408 = vmatpush1.msra.mxu0 0.0
        %409 = vmatprep.subr.mxu0 0.0
        %410 = vmatpush1.msra.mxu0 0.0
        %411 = vmatprep.subr.mxu0 0.0
        %412 = vmatpush1.msra.mxu0 0.0
        %413 = vmatprep.subr.mxu0 0.0
        %414 = vmatpush1.msra.mxu0 0.0
        %415 = vmatprep.subr.mxu0 0.0
        %416 = vmatpush1.msra.mxu0 0.0
        %417 = vmatprep.subr.mxu0 0.0
        %418 = vmatpush1.msra.mxu0 0.0
        %419 = vmatprep.subr.mxu0 0.0
        %420 = vmatpush1.msra.mxu0 0.0
        %421 = vmatprep.subr.mxu0 0.0
        %422 = vmatpush1.msra.mxu0 0.0
        %423 = vmatprep.subr.mxu0 0.0
        %424 = vmatpush1.msra.mxu0 0.0
        %425 = vmatprep.subr.mxu0 0.0
        %426 = vmatpush1.msra.mxu0 0.0
        %427 = vmatprep.mubr.f32.mxu0 0.0
        %428 = vmatmul.mubr.f32.gmra.mrb[0].mxu0 %v268
        %v429 = vpop.f32.mrb[0].mxu0
        %v430 = vadd.f32 %v264, %v429
        %v431 = vpop.f32.mrb[0].mxu0
        %432 = vmatprep.mubr.f32.mxu0 0.0
        %433 = vmatmul.mubr.f32.gmra.mrb[0].mxu0 %v271
        %v434 = vpop.f32.mrb[0].mxu0
        %v435 = vadd.f32 %v264, %v434
        %v436 = vpop.f32.mrb[0].mxu0
        %437 = vmatprep.mubr.f32.mxu0 0.0
        %438 = vmatmul.mubr.f32.gmra.mrb[0].mxu0 %v274
        %v439 = vpop.f32.mrb[0].mxu0
        %v440 = vadd.f32 %v264, %v439
        %v441 = vpop.f32.mrb[0].mxu0
        %442 = vmatprep.mubr.f32.mxu0 0.0
        %443 = vmatmul.mubr.f32.gmra.mrb[0].mxu0 %v277
        %v444 = vpop.f32.mrb[0].mxu0
        %v445 = vadd.f32 %v264, %v444
        %v446 = vpop.f32.mrb[0].mxu0
        %447 = vmatprep.mubr.f32.mxu0 0.0
        %448 = vmatmul.mubr.f32.gmra.mrb[0].mxu0 %v280
        %v449 = vpop.f32.mrb[0].mxu0
        %v450 = vadd.f32 %v264, %v449
        %v451 = vpop.f32.mrb[0].mxu0
        %452 = vmatprep.mubr.f32.mxu0 0.0
        %453 = vmatmul.mubr.f32.gmra.mrb[0].mxu0 %v283
        %v454 = vpop.f32.mrb[0].mxu0
        %v455 = vadd.f32 %v264, %v454
        %v456 = vpop.f32.mrb[0].mxu0
        %457 = vmatprep.mubr.f32.mxu0 0.0
        %458 = vmatmul.mubr.f32.gmra.mrb[0].mxu0 %v286
        %v459 = vpop.f32.mrb[0].mxu0
        %v460 = vadd.f32 %v264, %v459
        %v461 = vpop.f32.mrb[0].mxu0
        %462 = vmatprep.mubr.f32.mxu0 0.0
        %463 = vmatmul.mubr.f32.gmra.mrb[0].mxu0 %v289
        %v464 = vpop.f32.mrb[0].mxu0
        %v465 = vadd.f32 %v264, %v464
        %v466 = vpop.f32.mrb[0].mxu0
        %467 = vmatprep.mubr.f32.mxu0 0.0
        %468 = vmatmul.mubr.f32.gmra.mrb[0].mxu0 %v292
        %v469 = vpop.f32.mrb[0].mxu0
        %v470 = vadd.f32 %v264, %v469
        %v471 = vpop.f32.mrb[0].mxu0
        %472 = vmatprep.mubr.f32.mxu0 0.0
        %473 = vmatmul.mubr.f32.gmra.mrb[0].mxu0 %v295
        %v474 = vpop.f32.mrb[0].mxu0
        %v475 = vadd.f32 %v264, %v474
        %v476 = vpop.f32.mrb[0].mxu0
        %477 = vmatprep.mubr.f32.mxu0 0.0
        %478 = vmatmul.mubr.f32.gmra.mrb[0].mxu0 %v298
        %v479 = vpop.f32.mrb[0].mxu0
        %v480 = vadd.f32 %v264, %v479
        %v481 = vpop.f32.mrb[0].mxu0
        %482 = vmatprep.mubr.f32.mxu0 0.0
        %483 = vmatmul.mubr.f32.gmra.mrb[0].mxu0 %v301
        %v484 = vpop.f32.mrb[0].mxu0
        %v485 = vadd.f32 %v264, %v484
        %v486 = vpop.f32.mrb[0].mxu0
        %487 = vmatprep.mubr.f32.mxu0 0.0
        %488 = vmatmul.mubr.f32.gmra.mrb[0].mxu0 %v304
        %v489 = vpop.f32.mrb[0].mxu0
        %v490 = vadd.f32 %v264, %v489
        %v491 = vpop.f32.mrb[0].mxu0
        %492 = vmatprep.mubr.f32.mxu0 0.0
        %493 = vmatmul.mubr.f32.gmra.mrb[0].mxu0 %v307
        %v494 = vpop.f32.mrb[0].mxu0
        %v495 = vadd.f32 %v264, %v494
        %v496 = vpop.f32.mrb[0].mxu0
        %497 = vmatprep.mubr.f32.mxu0 0.0
        %498 = vmatmul.mubr.f32.gmra.mrb[0].mxu0 %v310
        %v499 = vpop.f32.mrb[0].mxu0
        %v500 = vadd.f32 %v264, %v499
        %v501 = vpop.f32.mrb[0].mxu0
        %502 = vmatprep.mubr.f32.mxu0 0.0
        %503 = vmatmul.mubr.f32.gmra.mrb[0].mxu0 %v313
        %v504 = vpop.f32.mrb[0].mxu0
        %v505 = vadd.f32 %v264, %v504
        %v506 = vpop.f32.mrb[0].mxu0
        %507 = vmatprep.mubr.f32.mxu0 0.0
        %508 = vmatmul.mubr.f32.gmra.mrb[0].mxu0 %v316
        %v509 = vpop.f32.mrb[0].mxu0
        %v510 = vadd.f32 %v264, %v509
        %v511 = vpop.f32.mrb[0].mxu0
        %512 = vmatprep.mubr.f32.mxu0 0.0
        %513 = vmatmul.mubr.f32.gmra.mrb[0].mxu0 %v319
        %v514 = vpop.f32.mrb[0].mxu0
        %v515 = vadd.f32 %v264, %v514
        %v516 = vpop.f32.mrb[0].mxu0
        %517 = vmatprep.mubr.f32.mxu0 0.0
        %518 = vmatmul.mubr.f32.gmra.mrb[0].mxu0 %v322
        %v519 = vpop.f32.mrb[0].mxu0
        %v520 = vadd.f32 %v264, %v519
        %v521 = vpop.f32.mrb[0].mxu0
        %522 = vmatprep.mubr.f32.mxu0 0.0
        %523 = vmatmul.mubr.f32.gmra.mrb[0].mxu0 %v325
        %v524 = vpop.f32.mrb[0].mxu0
        %v525 = vadd.f32 %v264, %v524
        %v526 = vpop.f32.mrb[0].mxu0
        %527 = vmatprep.mubr.f32.mxu0 0.0
        %528 = vmatmul.mubr.f32.gmra.mrb[0].mxu0 %v328
        %v529 = vpop.f32.mrb[0].mxu0
        %v530 = vadd.f32 %v264, %v529
        %v531 = vpop.f32.mrb[0].mxu0
        %532 = vmatprep.mubr.f32.mxu0 0.0
        %533 = vmatmul.mubr.f32.gmra.mrb[0].mxu0 %v331
        %v534 = vpop.f32.mrb[0].mxu0
        %v535 = vadd.f32 %v264, %v534
        %v536 = vpop.f32.mrb[0].mxu0
        %537 = vmatprep.mubr.f32.mxu0 0.0
        %538 = vmatmul.mubr.f32.gmra.mrb[0].mxu0 %v334
        %v539 = vpop.f32.mrb[0].mxu0
        %v540 = vadd.f32 %v264, %v539
        %v541 = vpop.f32.mrb[0].mxu0
        %542 = vmatprep.mubr.f32.mxu0 0.0
        %543 = vmatmul.mubr.f32.gmra.mrb[0].mxu0 %v337
        %v544 = vpop.f32.mrb[0].mxu0
        %v545 = vadd.f32 %v264, %v544
        %v546 = vpop.f32.mrb[0].mxu0
        %547 = vmatprep.mubr.f32.mxu0 0.0
        %548 = vmatmul.mubr.f32.gmra.mrb[0].mxu0 %v340
        %v549 = vpop.f32.mrb[0].mxu0
        %v550 = vadd.f32 %v264, %v549
        %v551 = vpop.f32.mrb[0].mxu0
        %552 = vmatprep.mubr.f32.mxu0 0.0
        %553 = vmatmul.mubr.f32.gmra.mrb[0].mxu0 %v343
        %v554 = vpop.f32.mrb[0].mxu0
        %v555 = vadd.f32 %v264, %v554
        %v556 = vpop.f32.mrb[0].mxu0
        %557 = vmatprep.mubr.f32.mxu0 0.0
        %558 = vmatmul.mubr.f32.gmra.mrb[0].mxu0 %v346
        %v559 = vpop.f32.mrb[0].mxu0
        %v560 = vadd.f32 %v264, %v559
        %v561 = vpop.f32.mrb[0].mxu0
        %562 = vmatprep.mubr.f32.mxu0 0.0
        %563 = vmatmul.mubr.f32.gmra.mrb[0].mxu0 %v349
        %v564 = vpop.f32.mrb[0].mxu0
        %v565 = vadd.f32 %v264, %v564
        %v566 = vpop.f32.mrb[0].mxu0
        %567 = vmatprep.mubr.f32.mxu0 0.0
        %568 = vmatmul.mubr.f32.gmra.mrb[0].mxu0 %v352
        %v569 = vpop.f32.mrb[0].mxu0
        %v570 = vadd.f32 %v264, %v569
        %v571 = vpop.f32.mrb[0].mxu0
        %572 = vmatprep.mubr.f32.mxu0 0.0
        %573 = vmatmul.mubr.f32.gmra.mrb[0].mxu0 %v355
        %v574 = vpop.f32.mrb[0].mxu0
        %v575 = vadd.f32 %v264, %v574
        %v576 = vpop.f32.mrb[0].mxu0
        %577 = vmatprep.mubr.f32.mxu0 0.0
        %578 = vmatmul.mubr.f32.gmra.mrb[0].mxu0 %v358
        %v579 = vpop.f32.mrb[0].mxu0
        %v580 = vadd.f32 %v264, %v579
        %v581 = vpop.f32.mrb[0].mxu0
        %582 = vmatprep.mubr.f32.mxu0 0.0
        %583 = vmatmul.mubr.f32.gmra.mrb[0].mxu0 %v361
        %v584 = vpop.f32.mrb[0].mxu0
        %v585 = vadd.f32 %v264, %v584
        %v586 = vpop.f32.mrb[0].mxu0
        %587 = vdwg.mxu0
        %v588 = vmax.f32 %v430, 0.0
        %v589 = vmax.f32 %v435, 0.0
        %v590 = vmax.f32 %v440, 0.0
        %v591 = vmax.f32 %v445, 0.0
        %v592 = vmax.f32 %v450, 0.0
        %v593 = vmax.f32 %v455, 0.0
        %v594 = vmax.f32 %v460, 0.0
        %v595 = vmax.f32 %v465, 0.0
        %v596 = vmax.f32 %v470, 0.0
        %v597 = vmax.f32 %v475, 0.0
        %v598 = vmax.f32 %v480, 0.0
        %v599 = vmax.f32 %v485, 0.0
        %v600 = vmax.f32 %v490, 0.0
        %v601 = vmax.f32 %v495, 0.0
        %v602 = vmax.f32 %v500, 0.0
        %v603 = vmax.f32 %v505, 0.0
        %v604 = vmax.f32 %v510, 0.0
        %v605 = vmax.f32 %v515, 0.0
        %v606 = vmax.f32 %v520, 0.0
        %v607 = vmax.f32 %v525, 0.0
        %v608 = vmax.f32 %v530, 0.0
        %v609 = vmax.f32 %v535, 0.0
        %v610 = vmax.f32 %v540, 0.0
        %v611 = vmax.f32 %v545, 0.0
        %v612 = vmax.f32 %v550, 0.0
        %v613 = vmax.f32 %v555, 0.0
        %v614 = vmax.f32 %v560, 0.0
        %v615 = vmax.f32 %v565, 0.0
        %v616 = vmax.f32 %v570, 0.0
        %v617 = vmax.f32 %v575, 0.0
        %v618 = vmax.f32 %v580, 0.0
        %v619 = vmax.f32 %v585, 0.0
        %v620 = vld [vmem:[%s3] sm:$0xff]
        %v621 = vld [vmem:[%s3 + $0x8] sm:$0xff]
        %v622 = vld [vmem:[%s3 + $0x10] sm:$0xff]
        %v623 = vld [vmem:[%s3 + $0x18] sm:$0xff]
        %v624 = vld [vmem:[%s3 + $0x20] sm:$0xff]
        %v625 = vld [vmem:[%s3 + $0x28] sm:$0xff]
        %v626 = vld [vmem:[%s3 + $0x30] sm:$0xff]
        %v627 = vld [vmem:[%s3 + $0x38] sm:$0xff]
        %v628 = vld [vmem:[%s3 + $0x40] sm:$0xff]
        %v629 = vld [vmem:[%s3 + $0x48] sm:$0xff]
        %v630 = vld [vmem:[%s3 + $0x50] sm:$0xff]
        %v631 = vld [vmem:[%s3 + $0x58] sm:$0xff]
        %v632 = vld [vmem:[%s3 + $0x60] sm:$0xff]
        %v633 = vld [vmem:[%s3 + $0x68] sm:$0xff]
        %v634 = vld [vmem:[%s3 + $0x70] sm:$0xff]
        %v635 = vld [vmem:[%s3 + $0x78] sm:$0xff]
        %v636 = vld [vmem:[%s4] sm:$0x1]
        %v638 = vlaneseq
        %v639 = vshrl.u32 %v638, 7
        %v640 = vsub.s32 0, %v639
        %v641 = vrot.slane %v636, %v640
        %643 = vmatprep.subr.mxu0 0.0
        %644 = vmatpush1.msra.mxu0 %v620
        %645 = vmatprep.subr.mxu0 0.0
        %646 = vmatpush1.msra.mxu0 %v621
        %647 = vmatprep.subr.mxu0 0.0
        %648 = vmatpush1.msra.mxu0 %v622
        %649 = vmatprep.subr.mxu0 0.0
        %650 = vmatpush1.msra.mxu0 %v623
        %651 = vmatprep.subr.mxu0 0.0
        %652 = vmatpush1.msra.mxu0 %v624
        %653 = vmatprep.subr.mxu0 0.0
        %654 = vmatpush1.msra.mxu0 %v625
        %655 = vmatprep.subr.mxu0 0.0
        %656 = vmatpush1.msra.mxu0 %v626
        %657 = vmatprep.subr.mxu0 0.0
        %658 = vmatpush1.msra.mxu0 %v627
        %659 = vmatprep.subr.mxu0 0.0
        %660 = vmatpush1.msra.mxu0 %v628
        %661 = vmatprep.subr.mxu0 0.0
        %662 = vmatpush1.msra.mxu0 %v629
        %663 = vmatprep.subr.mxu0 0.0
        %664 = vmatpush1.msra.mxu0 %v630
        %665 = vmatprep.subr.mxu0 0.0
        %666 = vmatpush1.msra.mxu0 %v631
        %667 = vmatprep.subr.mxu0 0.0
        %668 = vmatpush1.msra.mxu0 %v632
        %669 = vmatprep.subr.mxu0 0.0
        %670 = vmatpush1.msra.mxu0 %v633
        %671 = vmatprep.subr.mxu0 0.0
        %672 = vmatpush1.msra.mxu0 %v634
        %673 = vmatprep.subr.mxu0 0.0
        %674 = vmatpush1.msra.mxu0 %v635
        %675 = vmatprep.subr.mxu0 0.0
        %676 = vmatpush1.msra.mxu0 0.0
        %677 = vmatprep.subr.mxu0 0.0
        %678 = vmatpush1.msra.mxu0 0.0
        %679 = vmatprep.subr.mxu0 0.0
        %680 = vmatpush1.msra.mxu0 0.0
        %681 = vmatprep.subr.mxu0 0.0
        %682 = vmatpush1.msra.mxu0 0.0
        %683 = vmatprep.subr.mxu0 0.0
        %684 = vmatpush1.msra.mxu0 0.0
        %685 = vmatprep.subr.mxu0 0.0
        %686 = vmatpush1.msra.mxu0 0.0
        %687 = vmatprep.subr.mxu0 0.0
        %688 = vmatpush1.msra.mxu0 0.0
        %689 = vmatprep.subr.mxu0 0.0
        %690 = vmatpush1.msra.mxu0 0.0
        %691 = vmatprep.subr.mxu0 0.0
        %692 = vmatpush1.msra.mxu0 0.0
        %693 = vmatprep.subr.mxu0 0.0
        %694 = vmatpush1.msra.mxu0 0.0
        %695 = vmatprep.subr.mxu0 0.0
        %696 = vmatpush1.msra.mxu0 0.0
        %697 = vmatprep.subr.mxu0 0.0
        %698 = vmatpush1.msra.mxu0 0.0
        %699 = vmatprep.subr.mxu0 0.0
        %700 = vmatpush1.msra.mxu0 0.0
        %701 = vmatprep.subr.mxu0 0.0
        %702 = vmatpush1.msra.mxu0 0.0
        %703 = vmatprep.subr.mxu0 0.0
        %704 = vmatpush1.msra.mxu0 0.0
        %705 = vmatprep.subr.mxu0 0.0
        %706 = vmatpush1.msra.mxu0 0.0
        %707 = vmatprep.mubr.f32.mxu0 0.0
        %708 = vmatmul.mubr.f32.gmra.mrb[0].mxu0 %v588
        %v709 = vpop.f32.mrb[0].mxu0
        %v710 = vadd.f32 %v641, %v709
        %v711 = vpop.f32.mrb[0].mxu0
        %712 = vmatprep.mubr.f32.mxu0 0.0
        %713 = vmatmul.mubr.f32.gmra.mrb[0].mxu0 %v589
        %v714 = vpop.f32.mrb[0].mxu0
        %v715 = vadd.f32 %v641, %v714
        %v716 = vpop.f32.mrb[0].mxu0
        %717 = vmatprep.mubr.f32.mxu0 0.0
        %718 = vmatmul.mubr.f32.gmra.mrb[0].mxu0 %v590
        %v719 = vpop.f32.mrb[0].mxu0
        %v720 = vadd.f32 %v641, %v719
        %v721 = vpop.f32.mrb[0].mxu0
        %722 = vmatprep.mubr.f32.mxu0 0.0
        %723 = vmatmul.mubr.f32.gmra.mrb[0].mxu0 %v591
        %v724 = vpop.f32.mrb[0].mxu0
        %v725 = vadd.f32 %v641, %v724
        %v726 = vpop.f32.mrb[0].mxu0
        %727 = vmatprep.mubr.f32.mxu0 0.0
        %728 = vmatmul.mubr.f32.gmra.mrb[0].mxu0 %v592
        %v729 = vpop.f32.mrb[0].mxu0
        %v730 = vadd.f32 %v641, %v729
        %v731 = vpop.f32.mrb[0].mxu0
        %732 = vmatprep.mubr.f32.mxu0 0.0
        %733 = vmatmul.mubr.f32.gmra.mrb[0].mxu0 %v593
        %v734 = vpop.f32.mrb[0].mxu0
        %v735 = vadd.f32 %v641, %v734
        %v736 = vpop.f32.mrb[0].mxu0
        %737 = vmatprep.mubr.f32.mxu0 0.0
        %738 = vmatmul.mubr.f32.gmra.mrb[0].mxu0 %v594
        %v739 = vpop.f32.mrb[0].mxu0
        %v740 = vadd.f32 %v641, %v739
        %v741 = vpop.f32.mrb[0].mxu0
        %742 = vmatprep.mubr.f32.mxu0 0.0
        %743 = vmatmul.mubr.f32.gmra.mrb[0].mxu0 %v595
        %v744 = vpop.f32.mrb[0].mxu0
        %v745 = vadd.f32 %v641, %v744
        %v746 = vpop.f32.mrb[0].mxu0
        %747 = vmatprep.mubr.f32.mxu0 0.0
        %748 = vmatmul.mubr.f32.gmra.mrb[0].mxu0 %v596
        %v749 = vpop.f32.mrb[0].mxu0
        %v750 = vadd.f32 %v641, %v749
        %v751 = vpop.f32.mrb[0].mxu0
        %752 = vmatprep.mubr.f32.mxu0 0.0
        %753 = vmatmul.mubr.f32.gmra.mrb[0].mxu0 %v597
        %v754 = vpop.f32.mrb[0].mxu0
        %v755 = vadd.f32 %v641, %v754
        %v756 = vpop.f32.mrb[0].mxu0
        %757 = vmatprep.mubr.f32.mxu0 0.0
        %758 = vmatmul.mubr.f32.gmra.mrb[0].mxu0 %v598
        %v759 = vpop.f32.mrb[0].mxu0
        %v760 = vadd.f32 %v641, %v759
        %v761 = vpop.f32.mrb[0].mxu0
        %762 = vmatprep.mubr.f32.mxu0 0.0
        %763 = vmatmul.mubr.f32.gmra.mrb[0].mxu0 %v599
        %v764 = vpop.f32.mrb[0].mxu0
        %v765 = vadd.f32 %v641, %v764
        %v766 = vpop.f32.mrb[0].mxu0
        %767 = vmatprep.mubr.f32.mxu0 0.0
        %768 = vmatmul.mubr.f32.gmra.mrb[0].mxu0 %v600
        %v769 = vpop.f32.mrb[0].mxu0
        %v770 = vadd.f32 %v641, %v769
        %v771 = vpop.f32.mrb[0].mxu0
        %772 = vmatprep.mubr.f32.mxu0 0.0
        %773 = vmatmul.mubr.f32.gmra.mrb[0].mxu0 %v601
        %v774 = vpop.f32.mrb[0].mxu0
        %v775 = vadd.f32 %v641, %v774
        %v776 = vpop.f32.mrb[0].mxu0
        %777 = vmatprep.mubr.f32.mxu0 0.0
        %778 = vmatmul.mubr.f32.gmra.mrb[0].mxu0 %v602
        %v779 = vpop.f32.mrb[0].mxu0
        %v780 = vadd.f32 %v641, %v779
        %v781 = vpop.f32.mrb[0].mxu0
        %782 = vmatprep.mubr.f32.mxu0 0.0
        %783 = vmatmul.mubr.f32.gmra.mrb[0].mxu0 %v603
        %v784 = vpop.f32.mrb[0].mxu0
        %v785 = vadd.f32 %v641, %v784
        %v786 = vpop.f32.mrb[0].mxu0
        %787 = vmatprep.mubr.f32.mxu0 0.0
        %788 = vmatmul.mubr.f32.gmra.mrb[0].mxu0 %v604
        %v789 = vpop.f32.mrb[0].mxu0
        %v790 = vadd.f32 %v641, %v789
        %v791 = vpop.f32.mrb[0].mxu0
        %792 = vmatprep.mubr.f32.mxu0 0.0
        %793 = vmatmul.mubr.f32.gmra.mrb[0].mxu0 %v605
        %v794 = vpop.f32.mrb[0].mxu0
        %v795 = vadd.f32 %v641, %v794
        %v796 = vpop.f32.mrb[0].mxu0
        %797 = vmatprep.mubr.f32.mxu0 0.0
        %798 = vmatmul.mubr.f32.gmra.mrb[0].mxu0 %v606
        %v799 = vpop.f32.mrb[0].mxu0
        %v800 = vadd.f32 %v641, %v799
        %v801 = vpop.f32.mrb[0].mxu0
        %802 = vmatprep.mubr.f32.mxu0 0.0
        %803 = vmatmul.mubr.f32.gmra.mrb[0].mxu0 %v607
        %v804 = vpop.f32.mrb[0].mxu0
        %v805 = vadd.f32 %v641, %v804
        %v806 = vpop.f32.mrb[0].mxu0
        %807 = vmatprep.mubr.f32.mxu0 0.0
        %808 = vmatmul.mubr.f32.gmra.mrb[0].mxu0 %v608
        %v809 = vpop.f32.mrb[0].mxu0
        %v810 = vadd.f32 %v641, %v809
        %v811 = vpop.f32.mrb[0].mxu0
        %812 = vmatprep.mubr.f32.mxu0 0.0
        %813 = vmatmul.mubr.f32.gmra.mrb[0].mxu0 %v609
        %v814 = vpop.f32.mrb[0].mxu0
        %v815 = vadd.f32 %v641, %v814
        %v816 = vpop.f32.mrb[0].mxu0
        %817 = vmatprep.mubr.f32.mxu0 0.0
        %818 = vmatmul.mubr.f32.gmra.mrb[0].mxu0 %v610
        %v819 = vpop.f32.mrb[0].mxu0
        %v820 = vadd.f32 %v641, %v819
        %v821 = vpop.f32.mrb[0].mxu0
        %822 = vmatprep.mubr.f32.mxu0 0.0
        %823 = vmatmul.mubr.f32.gmra.mrb[0].mxu0 %v611
        %v824 = vpop.f32.mrb[0].mxu0
        %v825 = vadd.f32 %v641, %v824
        %v826 = vpop.f32.mrb[0].mxu0
        %827 = vmatprep.mubr.f32.mxu0 0.0
        %828 = vmatmul.mubr.f32.gmra.mrb[0].mxu0 %v612
        %v829 = vpop.f32.mrb[0].mxu0
        %v830 = vadd.f32 %v641, %v829
        %v831 = vpop.f32.mrb[0].mxu0
        %832 = vmatprep.mubr.f32.mxu0 0.0
        %833 = vmatmul.mubr.f32.gmra.mrb[0].mxu0 %v613
        %v834 = vpop.f32.mrb[0].mxu0
        %v835 = vadd.f32 %v641, %v834
        %v836 = vpop.f32.mrb[0].mxu0
        %837 = vmatprep.mubr.f32.mxu0 0.0
        %838 = vmatmul.mubr.f32.gmra.mrb[0].mxu0 %v614
        %v839 = vpop.f32.mrb[0].mxu0
        %v840 = vadd.f32 %v641, %v839
        %v841 = vpop.f32.mrb[0].mxu0
        %842 = vmatprep.mubr.f32.mxu0 0.0
        %843 = vmatmul.mubr.f32.gmra.mrb[0].mxu0 %v615
        %v844 = vpop.f32.mrb[0].mxu0
        %v845 = vadd.f32 %v641, %v844
        %v846 = vpop.f32.mrb[0].mxu0
        %847 = vmatprep.mubr.f32.mxu0 0.0
        %848 = vmatmul.mubr.f32.gmra.mrb[0].mxu0 %v616
        %v849 = vpop.f32.mrb[0].mxu0
        %v850 = vadd.f32 %v641, %v849
        %v851 = vpop.f32.mrb[0].mxu0
        %852 = vmatprep.mubr.f32.mxu0 0.0
        %853 = vmatmul.mubr.f32.gmra.mrb[0].mxu0 %v617
        %v854 = vpop.f32.mrb[0].mxu0
        %v855 = vadd.f32 %v641, %v854
        %v856 = vpop.f32.mrb[0].mxu0
        %857 = vmatprep.mubr.f32.mxu0 0.0
        %858 = vmatmul.mubr.f32.gmra.mrb[0].mxu0 %v618
        %v859 = vpop.f32.mrb[0].mxu0
        %v860 = vadd.f32 %v641, %v859
        %v861 = vpop.f32.mrb[0].mxu0
        %862 = vmatprep.mubr.f32.mxu0 0.0
        %863 = vmatmul.mubr.f32.gmra.mrb[0].mxu0 %v619
        %v864 = vpop.f32.mrb[0].mxu0
        %v865 = vadd.f32 %v641, %v864
        %v866 = vpop.f32.mrb[0].mxu0
        %867 = vdwg.mxu0
        %868 = vst [vmem:[%s218] sm:$0xff] %v710
        %869 = vst [vmem:[%s218 + $0x8] sm:$0xff] %v715
        %870 = vst [vmem:[%s218 + $0x10] sm:$0xff] %v720
        %871 = vst [vmem:[%s218 + $0x18] sm:$0xff] %v725
        %872 = vst [vmem:[%s218 + $0x20] sm:$0xff] %v730
        %873 = vst [vmem:[%s218 + $0x28] sm:$0xff] %v735
        %874 = vst [vmem:[%s218 + $0x30] sm:$0xff] %v740
        %875 = vst [vmem:[%s218 + $0x38] sm:$0xff] %v745
        %876 = vst [vmem:[%s218 + $0x40] sm:$0xff] %v750
        %877 = vst [vmem:[%s218 + $0x48] sm:$0xff] %v755
        %878 = vst [vmem:[%s218 + $0x50] sm:$0xff] %v760
        %879 = vst [vmem:[%s218 + $0x58] sm:$0xff] %v765
        %880 = vst [vmem:[%s218 + $0x60] sm:$0xff] %v770
        %881 = vst [vmem:[%s218 + $0x68] sm:$0xff] %v775
        %882 = vst [vmem:[%s218 + $0x70] sm:$0xff] %v780
        %883 = vst [vmem:[%s218 + $0x78] sm:$0xff] %v785
        %884 = vst [vmem:[%s218 + $0x80] sm:$0xff] %v790
        %885 = vst [vmem:[%s218 + $0x88] sm:$0xff] %v795
        %886 = vst [vmem:[%s218 + $0x90] sm:$0xff] %v800
        %887 = vst [vmem:[%s218 + $0x98] sm:$0xff] %v805
        %888 = vst [vmem:[%s218 + $0xa0] sm:$0xff] %v810
        %889 = vst [vmem:[%s218 + $0xa8] sm:$0xff] %v815
        %890 = vst [vmem:[%s218 + $0xb0] sm:$0xff] %v820
        %891 = vst [vmem:[%s218 + $0xb8] sm:$0xff] %v825
        %892 = vst [vmem:[%s218 + $0xc0] sm:$0xff] %v830
        %893 = vst [vmem:[%s218 + $0xc8] sm:$0xff] %v835
        %894 = vst [vmem:[%s218 + $0xd0] sm:$0xff] %v840
        %895 = vst [vmem:[%s218 + $0xd8] sm:$0xff] %v845
        %896 = vst [vmem:[%s218 + $0xe0] sm:$0xff] %v850
        %897 = vst [vmem:[%s218 + $0xe8] sm:$0xff] %v855
        %898 = vst [vmem:[%s218 + $0xf0] sm:$0xff] %v860
        %899 = vst [vmem:[%s218 + $0xf8] sm:$0xff] %v865
        %s900 = sand.u32 %s137, 1
        %s901 = scalar_lea.sflag [#allocation3], %s900
        %s902 = sand.u32 %s137, 1
        %s903 = smul.addr %s902, 256
        %s904 = scalar_lea.vmem [#allocation2], %s903
        // Predicated region
        $region41: #{tpu_custom_call.1} parent=39 // pred_check
          %p905 = pneg %p147
        $region42: #{tpu_custom_call.1} parent=39 // pred_check_branch
          %907 = sbr.rel (%p905) target = $region44
        $region43: #{tpu_custom_call.1} parent=39 // pred_region
          %s908 = smul.u32 32, %s19
          %s910 = ssub.s32 4096, 4096
          %911 = vsyncadd %s901, %s910
          %s912 = smul.addr %s908, 128
          %s913 = scalar_lea.hbm %s5, %s912
          %s914 = sshll.u32 %s904, 4
          %s915 = int_to_ptr.vmem [resolvable:$true] %s914
          %920 = dma.vmem_to_hbm [thread:$0]  %s915, 4096, %s913, %s901, 128, 128, 8
        $region44: #{tpu_custom_call.1} parent=39 // pred_fallthru
          _
      $region40: #{tpu_custom_call.1} parent=5 // pred_fallthru
        _
      %p921 = scmp.le.s32.totalorder 2, %s14
      // Predicated region
      $region45: #{tpu_custom_call.1} parent=5 // pred_check
        %p922 = pneg %p921
      $region46: #{tpu_custom_call.1} parent=5 // pred_check_branch
        %924 = sbr.rel (%p922) target = $region48
      $region47: #{tpu_custom_call.1} parent=5 // pred_region
        %s925 = ssub.s32 %s14, 2
        // Predicated region
        $region49: #{tpu_custom_call.1} parent=47 // pred_check
          %p926 = pneg %p153
        $region50: #{tpu_custom_call.1} parent=47 // pred_check_branch
          %928 = sbr.rel (%p926) target = $region52
        $region51: #{tpu_custom_call.1} parent=47 // pred_region
          %s929 = sand.u32 %s138, 1
          %s930 = scalar_lea.sflag [#allocation3], %s929
          %s931 = sand.u32 %s138, 1
          %s932 = smul.addr %s931, 256
          %s933 = scalar_lea.vmem [#allocation2], %s932
          %934 = dma.done %s930, 4096
        $region52: #{tpu_custom_call.1} parent=47 // pred_fallthru
          _
      $region48: #{tpu_custom_call.1} parent=5 // pred_fallthru
        _
    $region6: #{tpu_custom_call.1} parent=1 // loop_footer
      %s18 = sadd.s32 1, %s14
    $region7: #{tpu_custom_call.1} parent=1 // loop_footer_branch
      %13 = sbr.rel target = $region3
    $region8: #{tpu_custom_call.1} parent=1 // loop_exit
      _
    %935 = vsyncpa [#allocation3], 1
    %s936 = scalar_lea.sflag [#allocation3], 1
    %937 = vsyncpa %s936, 1

</llo_original>
